<compile_context>
chip_gen: v6e
topology: v6e:2x2x1
jax: 0.10.0
libtpu: 0.0.40
codegen_flags: <defaults>
</compile_context>

<pallas_src>
import functools

import numpy as np
import jax
import jax.numpy as jnp
from jax.experimental import pallas as pl
from jax.experimental.pallas import tpu as pltpu

LANE = 128
ROW_ALIGN = 16            # bf16 sublane packing: keep every row-block 16-aligned


def _round_up(x, m):
    return ((x + m - 1) // m) * m


# ----------------------------------------------------------------------------
# D_N group machinery (host-side glue: builds equivariant 1x1-conv weights)
# ----------------------------------------------------------------------------
def dihedral_elements(N):
    return [(f, r) for f in (0, 1) for r in range(N)]


def d_mul(g1, g2, N):
    # F^f1 R_r1 * F^f2 R_r2 = F^(f1^f2) R_((-1)^f2 * r1 + r2)
    f1, r1 = g1
    f2, r2 = g2
    return (f1 ^ f2, ((r1 if f2 == 0 else -r1) + r2) % N)


def regular_perm(g, N):
    elems = dihedral_elements(N)
    idx = {e: i for i, e in enumerate(elems)}
    G = 2 * N
    P = np.zeros((G, G), dtype=np.float64)
    for h in elems:
        P[idx[d_mul(g, h, N)], idx[h]] = 1.0
    return P


def quotient_perm(g, N):
    # quotient D_N / C_N : two cosets, flips swap them, rotations act trivially
    f, _ = g
    if f == 0:
        return np.eye(2)
    return np.array([[0.0, 1.0], [1.0, 0.0]])


def block_diag(blocks):
    n = sum(b.shape[0] for b in blocks)
    m = sum(b.shape[1] for b in blocks)
    out = np.zeros((n, m), dtype=np.float64)
    i = j = 0
    for b in blocks:
        out[i:i + b.shape[0], j:j + b.shape[1]] = b
        i += b.shape[0]
        j += b.shape[1]
    return out


def field_rep(g, N, n_reg, n_quot=0):
    R = regular_perm(g, N)
    Q = quotient_perm(g, N)
    return block_diag([R] * n_reg + [Q] * n_quot)


def project_equivariant(W0, b0, rep_out_fn, rep_in_fn, N):
    """W_eq = 1/|G| sum_g rho_out(g) W0 rho_in(g)^T ; b_eq = 1/|G| sum_g rho_out(g) b0."""
    elems = dihedral_elements(N)
    W = np.zeros_like(W0)
    b = np.zeros_like(b0)
    for g in elems:
        Ro = rep_out_fn(g)
        Ri = rep_in_fn(g)
        W += Ro @ W0 @ Ri.T
        b += Ro @ b0
    return W / len(elems), b / len(elems)


# ----------------------------------------------------------------------------
# Pallas kernel: fused  x@W1 + b1 -> ReLU -> @W2 + b2 -> ReLU -> @W3 + b3
# Weights/biases live in one packed bf16 (R, cols) buffer; static Python-int row
# offsets (zero runtime cost).  bf16 MXU matmuls, f32 accumulation.  Output is
# stored unpadded (last block dim equals the full output width c_out).
# ----------------------------------------------------------------------------
def _mlp_kernel(x_ref, p_ref, o_ref, *, k1, cols, c_out,
                off_w2, off_w3, off_b1, off_b2, off_b3):
    x = x_ref[...]                                                # (tb, k1) bf16

    h1 = jnp.dot(x, p_ref[0:k1, :], preferred_element_type=jnp.float32)
    h1 = jnp.maximum(h1 + p_ref[off_b1:off_b1 + 1, :], 0.0).astype(jnp.bfloat16)

    h2 = jnp.dot(h1, p_ref[off_w2:off_w2 + cols, :],
                 preferred_element_type=jnp.float32)
    h2 = jnp.maximum(h2 + p_ref[off_b2:off_b2 + 1, :], 0.0).astype(jnp.bfloat16)

    h3 = jnp.dot(h2, p_ref[off_w3:off_w3 + cols, :],
                 preferred_element_type=jnp.float32)
    h3 = h3 + p_ref[off_b3:off_b3 + 1, :]

    o_ref[...] = h3[:, :c_out].astype(o_ref.dtype)


def _choose_batch_tiling(B, batch_block):
    """Return (tile_rows, num_steps, padded_B).  Never produces a single giant
    block (VMEM safety), and gives >=2 grid steps for B >= 1024 so the
    'parallel' axis can shard across both v7x TensorCores."""
    n_steps = max(1, -(-B // batch_block))
    if n_steps == 1 and B >= 1024:
        n_steps = 2
    tb = _round_up(-(-B // n_steps), ROW_ALIGN)
    return tb, n_steps, tb * n_steps


def transition_d4_pallas(params, z, actions, *, batch_block=1024):
    meta = params["meta"]
    obs_dim = meta["obs_dim"]
    action_dim = meta["action_dim"]
    n2 = meta["n2"]
    c_out = meta["c_out"]
    k1 = meta["k1"]                       # padded layer-1 K (obs_c + action_dim, 16-aligned)
    cols = meta["cols"]
    obs_c = obs_dim * n2

    P = params["packed"]                  # (rows, cols) bf16
    B = z.shape[0]

    # self.first(z): (B, obs_dim, 2N) -> (B, obs_dim*2N); contiguous, bitcast-level.
    # Fold the action branch directly next to it (sign-folding already in the weights),
    # zero-pad the feature axis to the 16-aligned K used by the packed weight slab.
    z_flat = z.reshape(B, obs_c).astype(jnp.bfloat16)
    a = actions.astype(jnp.bfloat16)
    feat_pad = k1 - (obs_c + action_dim)
    parts = [z_flat, a]
    if feat_pad:
        parts.append(jnp.zeros((B, feat_pad), jnp.bfloat16))
    x = jnp.concatenate(parts, axis=1)                            # (B, k1)

    tb, n_steps, B_pad = _choose_batch_tiling(B, batch_block)
    if B_pad != B:
        x = jnp.pad(x, ((0, B_pad - B), (0, 0)))

    kernel = functools.partial(
        _mlp_kernel, k1=k1, cols=cols, c_out=c_out,
        off_w2=meta["off_w2"], off_w3=meta["off_w3"],
        off_b1=meta["off_b1"], off_b2=meta["off_b2"], off_b3=meta["off_b3"])

    flops = 2 * B_pad * cols * (k1 + 2 * cols)
    bytes_accessed = (B_pad * k1 * 2            # bf16 activations in
                      + P.shape[0] * cols * 2   # bf16 weight slab
                      + B_pad * c_out * 4)      # f32 output

    out = pl.pallas_call(
        kernel,
        out_shape=jax.ShapeDtypeStruct((B_pad, c_out), jnp.float32),
        grid=(n_steps,),
        in_specs=[
            pl.BlockSpec((tb, k1), lambda i: (i, 0)),
            pl.BlockSpec(P.shape, lambda i: (0, 0)),   # constant index -> VMEM-resident
        ],
        out_specs=pl.BlockSpec((tb, c_out), lambda i: (i, 0)),
        compiler_params=pltpu.CompilerParams(
            dimension_semantics=("parallel",)),
        cost_estimate=pl.CostEstimate(
            flops=flops, transcendentals=0, bytes_accessed=bytes_accessed),
    )(x, P)

    if B_pad != B:
        out = out[:B]
    # self.last reshape: (B, c_out) -> (B, obs_dim, 2N)
    return out.reshape(B, obs_dim, n2)


def transition_d4_reference(params, z, actions):
    """Pure-JAX f32 reference of the original forward pass (unfolded weights,
    explicit stack([a, -a]) + concat) for numerical verification."""
    meta = params["meta"]
    obs_dim, action_dim, n2 = meta["obs_dim"], meta["action_dim"], meta["n2"]
    r = params["ref"]
    B = z.shape[0]
    z_flat = z.reshape(B, obs_dim * n2).astype(jnp.float32)
    a_flat = jnp.stack([actions, -actions], axis=-1).reshape(B, action_dim * 2)
    x = jnp.concatenate([z_flat, a_flat.astype(jnp.float32)], axis=1)
    h1 = jnp.maximum(x @ r["w1"] + r["b1"], 0.0)
    h2 = jnp.maximum(h1 @ r["w2"] + r["b2"], 0.0)
    out = h2 @ r["w3"] + r["b3"]
    return out.reshape(B, obs_dim, n2)


def build_params(obs_dim, action_dim, group_order, hidden_dim, seed=42):
    """Deterministic D_N-equivariant weights for the three 1x1 R2Conv layers,
    packed into a single lane-dense bf16 buffer for the kernel."""
    N = group_order
    G = 2 * N
    obs_c = obs_dim * G
    c_in = obs_c + action_dim * 2               # feat_type_in (regular + quotient)
    c_h0 = hidden_dim[0] * G                    # feat_type_hid[0]
    c_h1 = hidden_dim[1] * G                    # feat_type_hid[1]
    c_out = obs_dim * G                         # feat_type_out

    rng = np.random.default_rng(seed)

    def rand_wb(co, ci):
        w = rng.standard_normal((co, ci)) * (1.0 / np.sqrt(ci))
        b = rng.standard_normal((co,)) * 0.1
        return w, b

    # TODO(synk): e2cnn's R2Conv basis-expansion parameterization has no Pallas
    # equivalent; equivariance is reproduced here via group-averaging projection.
    rep_in = lambda g: field_rep(g, N, obs_dim, action_dim)
    rep_h0 = lambda g: field_rep(g, N, hidden_dim[0])
    rep_h1 = lambda g: field_rep(g, N, hidden_dim[1])
    rep_out = lambda g: field_rep(g, N, obs_dim)

    w1, b1 = project_equivariant(*rand_wb(c_h0, c_in), rep_h0, rep_in, N)
    w2, b2 = project_equivariant(*rand_wb(c_h1, c_h0), rep_h1, rep_h0, N)
    w3, b3 = project_equivariant(*rand_wb(c_out, c_h1), rep_out, rep_h1, N)

    # Fold torch.stack([a, -a], dim=-1).view(...) into the action columns of w1:
    # interleaved columns are [+a_0, -a_0, +a_1, -a_1, ...].
    w1_z = w1[:, :obs_c]                               # (c_h0, obs_c)
    w1_a = w1[:, obs_c::2] - w1[:, obs_c + 1::2]       # (c_h0, action_dim)

    # Packed parameter buffer: all output widths zero-padded to `cols` (mult of 128),
    # row blocks 16-aligned so every in-kernel slice is sublane-pack aligned.
    cols = _round_up(max(c_h0, c_h1, c_out), LANE)
    k1 = _round_up(obs_c + action_dim, ROW_ALIGN)      # layer-1 K (matches padded input)
    off_w2 = k1
    off_w3 = off_w2 + cols
    off_b1 = off_w3 + cols
    off_b2 = off_b1 + ROW_ALIGN
    off_b3 = off_b2 + ROW_ALIGN
    total_rows = off_b3 + ROW_ALIGN

    P = np.zeros((total_rows, cols), dtype=np.float32)
    P[0:obs_c, :c_h0] = w1_z.T
    P[obs_c:obs_c + action_dim, :c_h0] = w1_a.T
    P[off_w2:off_w2 + c_h0, :c_h1] = w2.T
    P[off_w3:off_w3 + c_h1, :c_out] = w3.T
    P[off_b1, :c_h0] = b1
    P[off_b2, :c_h1] = b2
    P[off_b3, :c_out] = b3

    meta = dict(obs_dim=obs_dim, action_dim=action_dim, n2=G, c_out=c_out,
                k1=k1, cols=cols,
                off_w2=off_w2, off_w3=off_w3,
                off_b1=off_b1, off_b2=off_b2, off_b3=off_b3)

    ref = {
        "w1": jnp.asarray(w1.T, jnp.float32), "b1": jnp.asarray(b1[None, :], jnp.float32),
        "w2": jnp.asarray(w2.T, jnp.float32), "b2": jnp.asarray(b2[None, :], jnp.float32),
        "w3": jnp.asarray(w3.T, jnp.float32), "b3": jnp.asarray(b3[None, :], jnp.float32),
    }
    return {"packed": jnp.asarray(P, jnp.bfloat16), "meta": meta, "ref": ref}


if __name__ == "__main__":
    # small, module-consistent shapes
    obs_dim = 4
    action_dim = 2
    group_order = 4          # D4 -> group size 8
    hidden_dim = [8, 8]      # 8 regular fields per hidden layer -> 64 channels
    B = 2

    params = build_params(obs_dim, action_dim, group_order, hidden_dim, seed=42)

    key = jax.random.PRNGKey(0)
    kz, ka = jax.random.split(key)
    z = jax.random.normal(kz, (B, obs_dim, 2 * group_order), dtype=jnp.float32)
    actions = jax.random.normal(ka, (B, action_dim), dtype=jnp.float32)

    out = transition_d4_pallas(params, z, actions)
    out = jax.block_until_ready(out)

    ref = transition_d4_reference(params, z, actions)
    # bf16 matmuls with f32 accumulation vs pure-f32 reference -> loosened tolerance.
    np.testing.assert_allclose(np.asarray(out), np.asarray(ref), rtol=2e-2, atol=2e-2)

    assert out.shape == (B, obs_dim, 2 * group_order)
    print("KERNEL_OK")
</pallas_src>

<mosaic_0001>
module attributes {stable_mosaic.version = 11 : i64} {
  func.func @_mlp_kernel(%arg0: i32, %arg1: memref<16x48xbf16, #tpu.memory_space<vmem>>, %arg2: memref<352x128xbf16, #tpu.memory_space<vmem>>, %arg3: memref<16x32xf32, #tpu.memory_space<vmem>>) attributes {dimension_semantics = [#tpu.dimension_semantics<parallel>], iteration_bounds = array<i64: 1>, scalar_prefetch = 0 : i64, scratch_operands = 0 : i64, tpu.core_type = #tpu.core_type<tc>, window_params = [{transform_indices = @transform_0, window_bounds = array<i64: 16, 48>}, {pipeline_mode = #tpu.pipeline_mode<synchronous>, transform_indices = @transform_1, window_bounds = array<i64: 352, 128>}, {transform_indices = @transform_2, window_bounds = array<i64: 16, 32>}]} {
    %c0 = arith.constant 0 : index
    %c0_0 = arith.constant 0 : index
    %0 = vector.load %arg1[%c0, %c0_0] : memref<16x48xbf16, #tpu.memory_space<vmem>>, vector<16x48xbf16>
    %c0_1 = arith.constant 0 : index
    %c0_2 = arith.constant 0 : index
    %1 = vector.load %arg2[%c0_1, %c0_2] : memref<352x128xbf16, #tpu.memory_space<vmem>>, vector<48x128xbf16>
    %cst = arith.constant dense<0.000000e+00> : vector<16x128xf32>
    %2 = tpu.matmul %0, %1, %cst {dimension_numbers = #tpu.dot_dimension_numbers<[1], [0], [0], [1], [0, 0, 1, 1], [], []>} : vector<16x48xbf16>, vector<48x128xbf16>, vector<16x128xf32> -> vector<16x128xf32>
    %c304 = arith.constant 304 : index
    %c0_3 = arith.constant 0 : index
    %3 = vector.load %arg2[%c304, %c0_3] : memref<352x128xbf16, #tpu.memory_space<vmem>>, vector<1x128xbf16>
    %4 = arith.extf %3 : vector<1x128xbf16> to vector<1x128xf32>
    %5 = vector.broadcast %4 : vector<1x128xf32> to vector<16x128xf32>
    %6 = arith.addf %2, %5 : vector<16x128xf32>
    %cst_4 = arith.constant 0.000000e+00 : f32
    %7 = vector.broadcast %cst_4 : f32 to vector<16x128xf32>
    %8 = arith.maximumf %6, %7 : vector<16x128xf32>
    %9 = arith.truncf %8 : vector<16x128xf32> to vector<16x128xbf16>
    %c48 = arith.constant 48 : index
    %c0_5 = arith.constant 0 : index
    %10 = vector.load %arg2[%c48, %c0_5] : memref<352x128xbf16, #tpu.memory_space<vmem>>, vector<128x128xbf16>
    %cst_6 = arith.constant dense<0.000000e+00> : vector<16x128xf32>
    %11 = tpu.matmul %9, %10, %cst_6 {dimension_numbers = #tpu.dot_dimension_numbers<[1], [0], [0], [1], [0, 0, 1, 1], [], []>} : vector<16x128xbf16>, vector<128x128xbf16>, vector<16x128xf32> -> vector<16x128xf32>
    %c320 = arith.constant 320 : index
    %c0_7 = arith.constant 0 : index
    %12 = vector.load %arg2[%c320, %c0_7] : memref<352x128xbf16, #tpu.memory_space<vmem>>, vector<1x128xbf16>
    %13 = arith.extf %12 : vector<1x128xbf16> to vector<1x128xf32>
    %14 = vector.broadcast %13 : vector<1x128xf32> to vector<16x128xf32>
    %15 = arith.addf %11, %14 : vector<16x128xf32>
    %cst_8 = arith.constant 0.000000e+00 : f32
    %16 = vector.broadcast %cst_8 : f32 to vector<16x128xf32>
    %17 = arith.maximumf %15, %16 : vector<16x128xf32>
    %18 = arith.truncf %17 : vector<16x128xf32> to vector<16x128xbf16>
    %c176 = arith.constant 176 : index
    %c0_9 = arith.constant 0 : index
    %19 = vector.load %arg2[%c176, %c0_9] : memref<352x128xbf16, #tpu.memory_space<vmem>>, vector<128x128xbf16>
    %cst_10 = arith.constant dense<0.000000e+00> : vector<16x128xf32>
    %20 = tpu.matmul %18, %19, %cst_10 {dimension_numbers = #tpu.dot_dimension_numbers<[1], [0], [0], [1], [0, 0, 1, 1], [], []>} : vector<16x128xbf16>, vector<128x128xbf16>, vector<16x128xf32> -> vector<16x128xf32>
    %c336 = arith.constant 336 : index
    %c0_11 = arith.constant 0 : index
    %21 = vector.load %arg2[%c336, %c0_11] : memref<352x128xbf16, #tpu.memory_space<vmem>>, vector<1x128xbf16>
    %22 = arith.extf %21 : vector<1x128xbf16> to vector<1x128xf32>
    %23 = vector.broadcast %22 : vector<1x128xf32> to vector<16x128xf32>
    %24 = arith.addf %20, %23 : vector<16x128xf32>
    %25 = vector.extract_strided_slice %24 {offsets = [0, 0], sizes = [16, 32], strides = [1, 1]} : vector<16x128xf32> to vector<16x32xf32>
    %c0_12 = arith.constant 0 : index
    %c0_13 = arith.constant 0 : index
    %26 = vector.load %arg3[%c0_12, %c0_13] : memref<16x32xf32, #tpu.memory_space<vmem>>, vector<16x32xf32>
    tpu.vector_store %arg3[%c0_12, %c0_13], %25 {strides = array<i32>} : memref<16x32xf32, #tpu.memory_space<vmem>>, vector<16x32xf32>,
    return
  }
  func.func @transform_0(%arg0: i32) -> (i32, i32) {
    %c0_i32 = arith.constant 0 : i32
    %c0_i32_0 = arith.constant 0 : i32
    return %arg0, %c0_i32 : i32, i32
  }
  func.func @transform_1(%arg0: i32) -> (i32, i32) {
    %c0_i32 = arith.constant 0 : i32
    %c0_i32_0 = arith.constant 0 : i32
    %c0_i32_1 = arith.constant 0 : i32
    return %c0_i32, %c0_i32_0 : i32, i32
  }
  func.func @transform_2(%arg0: i32) -> (i32, i32) {
    %c0_i32 = arith.constant 0 : i32
    %c0_i32_0 = arith.constant 0 : i32
    return %arg0, %c0_i32 : i32, i32
  }
}

</mosaic_0001>

<llo_original>
// kernel: tpu_custom_call.1
$region0: #{tpu_custom_call.1}
  #allocation0 [shape = 'u32[]', space=smem, size = 0x4, offset = 0x4, fixed_abs, tag = 'smem constant byte address 0x4 - core index']
  #allocation1 [shape = 'u32[144,128]{1,0:T(1,128)}', space=vmem, size = 0x12000, scoped, tag = 'internal scratch']
  %s0 = inlined_call_operand.hbm [shape: bf16[16,48], index: 0, kind: input, shape index: {}]
  %s1 = inlined_call_operand.hbm [shape: bf16[352,128], index: 1, kind: input, shape index: {}]
  %s2 = inlined_call_operand.hbm [shape: f32[16,32], index: 2, kind: output, shape index: {}]
  %s3 = sld [smem:[#allocation0]]
  $region26: #{tpu_custom_call.1} parent=0
    _
  %s5 = ssub.s32 1, %s3
  %s6 = scalar_select 0, %s5, %s3
  $region1: #{tpu_custom_call.1} parent=0
    #allocation2 [shape = 'u8[4096]{0}', space=vmem, size = 0x1000, scoped, tag = 'input window, operand 0, single buffered']
    #allocation3 [shape = 's32[1]{0}', space=sflag, size = 0x4, scoped, tag = 'scoped memory for tpu_custom_call.1']
    #allocation4 [shape = 's32[1]{0}', space=sflag, size = 0x4, scoped, tag = 'scoped memory for tpu_custom_call.1']
    #allocation5 [shape = 'u8[90112]{0}', space=vmem, size = 0x16000, scoped, tag = 'input window, operand 1, single buffered']
    #allocation6 [shape = 's32[1]{0}', space=sflag, size = 0x4, scoped, tag = 'scoped memory for tpu_custom_call.1']
    #allocation7 [shape = 'u8[8192]{0}', space=vmem, size = 0x2000, scoped, tag = 'output window, operand 0, single buffered']
    %7 = vsyncpa [#allocation3], 0
    %8 = vsyncpa [#allocation6], 0
    %9 = vsyncpa [#allocation4], 0
    // Predicated region
    $region2: #{tpu_custom_call.1} parent=1 // pred_check
      _
    $region3: #{tpu_custom_call.1} parent=1 // pred_check_branch
      %11 = sbr.rel (0) target = $region5
    $region4: #{tpu_custom_call.1} parent=1 // pred_region
      %s13 = ssub.s32 128, 128
      %14 = vsyncadd [#allocation3], %s13
      %s15 = sshll.u32 [#allocation2], 4
      %s16 = int_to_ptr.vmem [resolvable:$true] %s15
      %21 = dma.hbm_to_vmem [thread:$0]  %s0, 128, %s16, [#allocation3], 64, 64, 4
    $region5: #{tpu_custom_call.1} parent=1 // pred_fallthru
      _
    // Predicated region
    $region6: #{tpu_custom_call.1} parent=1 // pred_check
      _
    $region7: #{tpu_custom_call.1} parent=1 // pred_check_branch
      %23 = sbr.rel (0) target = $region9
    $region8: #{tpu_custom_call.1} parent=1 // pred_region
      %s25 = ssub.s32 2816, 2816
      %26 = vsyncadd [#allocation6], %s25
      %s27 = sshll.u32 [#allocation5], 4
      %s28 = int_to_ptr.vmem [resolvable:$true] %s27
      %33 = dma.hbm_to_vmem [thread:$0]  %s1, 2816, %s28, [#allocation6], 64, 64, 4
    $region9: #{tpu_custom_call.1} parent=1 // pred_fallthru
      _
    // Predicated region
    $region10: #{tpu_custom_call.1} parent=1 // pred_check
      _
    $region11: #{tpu_custom_call.1} parent=1 // pred_check_branch
      %35 = sbr.rel (0) target = $region13
    $region12: #{tpu_custom_call.1} parent=1 // pred_region
      %36 = dma.done [#allocation3], 128
    $region13: #{tpu_custom_call.1} parent=1 // pred_fallthru
      _
    // Predicated region
    $region14: #{tpu_custom_call.1} parent=1 // pred_check
      _
    $region15: #{tpu_custom_call.1} parent=1 // pred_check_branch
      %38 = sbr.rel (0) target = $region17
    $region16: #{tpu_custom_call.1} parent=1 // pred_region
      %39 = dma.done [#allocation6], 2816
    $region17: #{tpu_custom_call.1} parent=1 // pred_fallthru
      _
    %v41 = vld [vmem:[#allocation2] sm:$0xf]
    %v42 = vld [vmem:[#allocation2 + $0x4] sm:$0xf]
    %v43 = vld [vmem:[#allocation5] sm:$0xf]
    %v44 = vld [vmem:[#allocation5 + $0x4] sm:$0xf]
    %v45 = vld [vmem:[#allocation5 + $0x8] sm:$0xf]
    %v46 = vld [vmem:[#allocation5 + $0xc] sm:$0xf]
    %v47 = vld [vmem:[#allocation5 + $0x10] sm:$0xf]
    %v48 = vld [vmem:[#allocation5 + $0x14] sm:$0xf]
    %v49 = vld [vmem:[#allocation5 + $0x98] sm:$0x1]
    %v50 = vunpack.c.l.bf16 %v49
    %v51 = vlaneseq
    %v52 = vshrl.u32 %v51, 7
    %v53 = vsub.s32 0, %v52
    %v54 = vrot.slane %v50, %v53
    %v57 = vunpack.c.l.b16 %v41
    %v58 = vunpack.c.l.b16 %v42
    %v59 = vpack.c.b16 %v58, %v57
    %v66 = vunpack.c.l.b16 %v43
    %v67 = vunpack.c.l.b16 %v44
    %v68 = vunpack.c.l.b16 %v45
    %v69 = vunpack.c.l.b16 %v46
    %v70 = vunpack.c.l.b16 %v47
    %v71 = vunpack.c.l.b16 %v48
    %v72 = vpack.c.b16 %v67, %v66
    %v73 = vpack.c.b16 %v69, %v68
    %v74 = vpack.c.b16 %v71, %v70
    %vm78 = vcmask 392192
    %v80 = vsel %vm78, %v59, 0
    %82 = vmatprep.subr.bf16.mxu0 0
    %83 = vmatpush1.bf16.msra.mxu0 0
    %84 = vmatprep.subr.bf16.mxu0 0
    %85 = vmatpush1.bf16.msra.mxu0 0
    %86 = vmatprep.subr.bf16.mxu0 0
    %87 = vmatpush1.bf16.msra.mxu0 0
    %88 = vmatprep.subr.bf16.mxu0 0
    %89 = vmatpush1.bf16.msra.mxu0 0
    %90 = vmatprep.subr.bf16.mxu0 0
    %91 = vmatpush1.bf16.msra.mxu0 0
    %92 = vmatprep.subr.bf16.mxu0 0
    %93 = vmatpush1.bf16.msra.mxu0 %v74
    %94 = vmatprep.subr.bf16.mxu0 0
    %95 = vmatpush1.bf16.msra.mxu0 %v73
    %96 = vmatprep.subr.bf16.mxu0 0
    %97 = vmatpush1.bf16.msra.mxu0 %v72
    %98 = vmatprep.subr.bf16.mxu0 0
    %99 = vmatpush2.bf16.msra.mxu0 0
    %100 = vmatprep.subr.bf16.mxu0 0
    %101 = vmatpush2.bf16.msra.mxu0 0
    %102 = vmatprep.subr.bf16.mxu0 0
    %103 = vmatpush2.bf16.msra.mxu0 0
    %104 = vmatprep.subr.bf16.mxu0 0
    %105 = vmatpush2.bf16.msra.mxu0 0
    %106 = vmatprep.subr.bf16.mxu0 0
    %107 = vmatpush2.bf16.msra.mxu0 0
    %108 = vmatprep.subr.bf16.mxu0 0
    %109 = vmatpush2.bf16.msra.mxu0 0
    %110 = vmatprep.subr.bf16.mxu0 0
    %111 = vmatpush2.bf16.msra.mxu0 0
    %112 = vmatprep.subr.bf16.mxu0 0
    %113 = vmatpush2.bf16.msra.mxu0 0
    %114 = vmatprep.mubr.bf16.mxu0 0
    %115 = vmatmul.mubr.bf16.gmra.mxu0 %v80
    %v116 = vpop.f32.mrf.mxu0
    %v117 = vadd.f32 %v54, %v116
    %v118 = vpop.f32.mrf.mxu0
    %v119 = vpop.f32.mrf.mxu0
    %v120 = vadd.f32 %v54, %v119
    %v121 = vpop.f32.mrf.mxu0
    %122 = vdwg.mxu0
    %v123 = vmax.f32 %v117, 0.0
    %v124 = vmax.f32 %v120, 0.0
    %v125 = vpack.c.bf16 %v124, %v123
    %v126 = vld [vmem:[#allocation5 + $0x18] sm:$0xf]
    %v127 = vld [vmem:[#allocation5 + $0x1c] sm:$0xf]
    %v128 = vld [vmem:[#allocation5 + $0x20] sm:$0xf]
    %v129 = vld [vmem:[#allocation5 + $0x24] sm:$0xf]
    %v130 = vld [vmem:[#allocation5 + $0x28] sm:$0xf]
    %v131 = vld [vmem:[#allocation5 + $0x2c] sm:$0xf]
    %v132 = vld [vmem:[#allocation5 + $0x30] sm:$0xf]
    %v133 = vld [vmem:[#allocation5 + $0x34] sm:$0xf]
    %v134 = vld [vmem:[#allocation5 + $0x38] sm:$0xf]
    %v135 = vld [vmem:[#allocation5 + $0x3c] sm:$0xf]
    %v136 = vld [vmem:[#allocation5 + $0x40] sm:$0xf]
    %v137 = vld [vmem:[#allocation5 + $0x44] sm:$0xf]
    %v138 = vld [vmem:[#allocation5 + $0x48] sm:$0xf]
    %v139 = vld [vmem:[#allocation5 + $0x4c] sm:$0xf]
    %v140 = vld [vmem:[#allocation5 + $0x50] sm:$0xf]
    %v141 = vld [vmem:[#allocation5 + $0x54] sm:$0xf]
    %v142 = vld [vmem:[#allocation5 + $0xa0] sm:$0x1]
    %v143 = vunpack.c.l.bf16 %v142
    %v144 = vlaneseq
    %v145 = vshrl.u32 %v144, 7
    %v146 = vsub.s32 0, %v145
    %v147 = vrot.slane %v143, %v146
    %v164 = vunpack.c.l.b16 %v126
    %v165 = vunpack.c.l.b16 %v127
    %v166 = vunpack.c.l.b16 %v128
    %v167 = vunpack.c.l.b16 %v129
    %v168 = vunpack.c.l.b16 %v130
    %v169 = vunpack.c.l.b16 %v131
    %v170 = vunpack.c.l.b16 %v132
    %v171 = vunpack.c.l.b16 %v133
    %v172 = vunpack.c.l.b16 %v134
    %v173 = vunpack.c.l.b16 %v135
    %v174 = vunpack.c.l.b16 %v136
    %v175 = vunpack.c.l.b16 %v137
    %v176 = vunpack.c.l.b16 %v138
    %v177 = vunpack.c.l.b16 %v139
    %v178 = vunpack.c.l.b16 %v140
    %v179 = vunpack.c.l.b16 %v141
    %v180 = vpack.c.b16 %v165, %v164
    %v181 = vpack.c.b16 %v167, %v166
    %v182 = vpack.c.b16 %v169, %v168
    %v183 = vpack.c.b16 %v171, %v170
    %v184 = vpack.c.b16 %v173, %v172
    %v185 = vpack.c.b16 %v175, %v174
    %v186 = vpack.c.b16 %v177, %v176
    %v187 = vpack.c.b16 %v179, %v178
    %196 = vmatprep.subr.bf16.mxu0 0
    %197 = vmatpush1.bf16.msra.mxu0 %v187
    %198 = vmatprep.subr.bf16.mxu0 0
    %199 = vmatpush1.bf16.msra.mxu0 %v186
    %200 = vmatprep.subr.bf16.mxu0 0
    %201 = vmatpush1.bf16.msra.mxu0 %v185
    %202 = vmatprep.subr.bf16.mxu0 0
    %203 = vmatpush1.bf16.msra.mxu0 %v184
    %204 = vmatprep.subr.bf16.mxu0 0
    %205 = vmatpush1.bf16.msra.mxu0 %v183
    %206 = vmatprep.subr.bf16.mxu0 0
    %207 = vmatpush1.bf16.msra.mxu0 %v182
    %208 = vmatprep.subr.bf16.mxu0 0
    %209 = vmatpush1.bf16.msra.mxu0 %v181
    %210 = vmatprep.subr.bf16.mxu0 0
    %211 = vmatpush1.bf16.msra.mxu0 %v180
    %212 = vmatprep.subr.bf16.mxu0 0
    %213 = vmatpush2.bf16.msra.mxu0 0
    %214 = vmatprep.subr.bf16.mxu0 0
    %215 = vmatpush2.bf16.msra.mxu0 0
    %216 = vmatprep.subr.bf16.mxu0 0
    %217 = vmatpush2.bf16.msra.mxu0 0
    %218 = vmatprep.subr.bf16.mxu0 0
    %219 = vmatpush2.bf16.msra.mxu0 0
    %220 = vmatprep.subr.bf16.mxu0 0
    %221 = vmatpush2.bf16.msra.mxu0 0
    %222 = vmatprep.subr.bf16.mxu0 0
    %223 = vmatpush2.bf16.msra.mxu0 0
    %224 = vmatprep.subr.bf16.mxu0 0
    %225 = vmatpush2.bf16.msra.mxu0 0
    %226 = vmatprep.subr.bf16.mxu0 0
    %227 = vmatpush2.bf16.msra.mxu0 0
    %228 = vmatprep.mubr.bf16.mxu0 0
    %229 = vmatmul.mubr.bf16.gmra.mxu0 %v125
    %v230 = vpop.f32.mrf.mxu0
    %v231 = vadd.f32 %v147, %v230
    %v232 = vpop.f32.mrf.mxu0
    %v233 = vpop.f32.mrf.mxu0
    %v234 = vadd.f32 %v147, %v233
    %v235 = vpop.f32.mrf.mxu0
    %236 = vdwg.mxu0
    %v237 = vmax.f32 %v231, 0.0
    %v238 = vmax.f32 %v234, 0.0
    %v239 = vpack.c.bf16 %v238, %v237
    %v240 = vld [vmem:[#allocation5 + $0x58] sm:$0xf]
    %v241 = vld [vmem:[#allocation5 + $0x5c] sm:$0xf]
    %v242 = vld [vmem:[#allocation5 + $0x60] sm:$0xf]
    %v243 = vld [vmem:[#allocation5 + $0x64] sm:$0xf]
    %v244 = vld [vmem:[#allocation5 + $0x68] sm:$0xf]
    %v245 = vld [vmem:[#allocation5 + $0x6c] sm:$0xf]
    %v246 = vld [vmem:[#allocation5 + $0x70] sm:$0xf]
    %v247 = vld [vmem:[#allocation5 + $0x74] sm:$0xf]
    %v248 = vld [vmem:[#allocation5 + $0x78] sm:$0xf]
    %v249 = vld [vmem:[#allocation5 + $0x7c] sm:$0xf]
    %v250 = vld [vmem:[#allocation5 + $0x80] sm:$0xf]
    %v251 = vld [vmem:[#allocation5 + $0x84] sm:$0xf]
    %v252 = vld [vmem:[#allocation5 + $0x88] sm:$0xf]
    %v253 = vld [vmem:[#allocation5 + $0x8c] sm:$0xf]
    %v254 = vld [vmem:[#allocation5 + $0x90] sm:$0xf]
    %v255 = vld [vmem:[#allocation5 + $0x94] sm:$0xf]
    %v256 = vld [vmem:[#allocation5 + $0xa8] sm:$0x1]
    %v257 = vunpack.c.l.bf16 %v256
    %v258 = vlaneseq
    %v259 = vshrl.u32 %v258, 7
    %v260 = vsub.s32 0, %v259
    %v261 = vrot.slane %v257, %v260
    %v278 = vunpack.c.l.b16 %v240
    %v279 = vunpack.c.l.b16 %v241
    %v280 = vunpack.c.l.b16 %v242
    %v281 = vunpack.c.l.b16 %v243
    %v282 = vunpack.c.l.b16 %v244
    %v283 = vunpack.c.l.b16 %v245
    %v284 = vunpack.c.l.b16 %v246
    %v285 = vunpack.c.l.b16 %v247
    %v286 = vunpack.c.l.b16 %v248
    %v287 = vunpack.c.l.b16 %v249
    %v288 = vunpack.c.l.b16 %v250
    %v289 = vunpack.c.l.b16 %v251
    %v290 = vunpack.c.l.b16 %v252
    %v291 = vunpack.c.l.b16 %v253
    %v292 = vunpack.c.l.b16 %v254
    %v293 = vunpack.c.l.b16 %v255
    %v294 = vpack.c.b16 %v279, %v278
    %v295 = vpack.c.b16 %v281, %v280
    %v296 = vpack.c.b16 %v283, %v282
    %v297 = vpack.c.b16 %v285, %v284
    %v298 = vpack.c.b16 %v287, %v286
    %v299 = vpack.c.b16 %v289, %v288
    %v300 = vpack.c.b16 %v291, %v290
    %v301 = vpack.c.b16 %v293, %v292
    %310 = vmatprep.subr.bf16.mxu0 0
    %311 = vmatpush1.bf16.msra.mxu0 %v301
    %312 = vmatprep.subr.bf16.mxu0 0
    %313 = vmatpush1.bf16.msra.mxu0 %v300
    %314 = vmatprep.subr.bf16.mxu0 0
    %315 = vmatpush1.bf16.msra.mxu0 %v299
    %316 = vmatprep.subr.bf16.mxu0 0
    %317 = vmatpush1.bf16.msra.mxu0 %v298
    %318 = vmatprep.subr.bf16.mxu0 0
    %319 = vmatpush1.bf16.msra.mxu0 %v297
    %320 = vmatprep.subr.bf16.mxu0 0
    %321 = vmatpush1.bf16.msra.mxu0 %v296
    %322 = vmatprep.subr.bf16.mxu0 0
    %323 = vmatpush1.bf16.msra.mxu0 %v295
    %324 = vmatprep.subr.bf16.mxu0 0
    %325 = vmatpush1.bf16.msra.mxu0 %v294
    %326 = vmatprep.subr.bf16.mxu0 0
    %327 = vmatpush2.bf16.msra.mxu0 0
    %328 = vmatprep.subr.bf16.mxu0 0
    %329 = vmatpush2.bf16.msra.mxu0 0
    %330 = vmatprep.subr.bf16.mxu0 0
    %331 = vmatpush2.bf16.msra.mxu0 0
    %332 = vmatprep.subr.bf16.mxu0 0
    %333 = vmatpush2.bf16.msra.mxu0 0
    %334 = vmatprep.subr.bf16.mxu0 0
    %335 = vmatpush2.bf16.msra.mxu0 0
    %336 = vmatprep.subr.bf16.mxu0 0
    %337 = vmatpush2.bf16.msra.mxu0 0
    %338 = vmatprep.subr.bf16.mxu0 0
    %339 = vmatpush2.bf16.msra.mxu0 0
    %340 = vmatprep.subr.bf16.mxu0 0
    %341 = vmatpush2.bf16.msra.mxu0 0
    %342 = vmatprep.mubr.bf16.mxu0 0
    %343 = vmatmul.mubr.bf16.gmra.mxu0 %v239
    %v344 = vpop.f32.mrf.mxu0
    %v345 = vadd.f32 %v261, %v344
    %v346 = vpop.f32.mrf.mxu0
    %v347 = vpop.f32.mrf.mxu0
    %v348 = vadd.f32 %v261, %v347
    %v349 = vpop.f32.mrf.mxu0
    %350 = vdwg.mxu0
    %vm351 = vcmask 261120
    %352 = vst.msk [vmem:[#allocation7] sm:$0xff] %vm351, %v345
    %353 = vst.msk [vmem:[#allocation7 + $0x8] sm:$0xff] %vm351, %v348
    // Predicated region
    $region18: #{tpu_custom_call.1} parent=1 // pred_check
      _
    $region19: #{tpu_custom_call.1} parent=1 // pred_check_branch
      %355 = sbr.rel (0) target = $region21
    $region20: #{tpu_custom_call.1} parent=1 // pred_region
      %s357 = ssub.s32 256, 256
      %358 = vsyncadd [#allocation4], %s357
      %s359 = sshll.u32 [#allocation7], 4
      %s360 = int_to_ptr.vmem [resolvable:$true] %s359
      %365 = dma.vmem_to_hbm [thread:$0]  %s360, 256, %s2, [#allocation4], 128, 128, 8
    $region21: #{tpu_custom_call.1} parent=1 // pred_fallthru
      _
    // Predicated region
    $region22: #{tpu_custom_call.1} parent=1 // pred_check
      _
    $region23: #{tpu_custom_call.1} parent=1 // pred_check_branch
      %367 = sbr.rel (0) target = $region25
    $region24: #{tpu_custom_call.1} parent=1 // pred_region
      %368 = dma.done [#allocation4], 256
    $region25: #{tpu_custom_call.1} parent=1 // pred_fallthru
      _
    %369 = vsyncpa [#allocation3], 1
    %370 = vsyncpa [#allocation6], 1
    %371 = vsyncpa [#allocation4], 1

</llo_original>
